<compile_context>
chip_gen: v6e
topology: v6e:2x2x1
jax: 0.10.0
libtpu: 0.0.40
codegen_flags: <defaults>
</compile_context>

<pallas_src>
import functools

import jax
import jax.numpy as jnp
from jax.experimental import pallas as pl
from jax.experimental.pallas import tpu as pltpu


# ----------------------------- small helpers ---------------------------------

def _round_up(x, m):
    return ((x + m - 1) // m) * m


def _sublane_multiple(dtype):
    return {4: 8, 2: 16, 1: 32}.get(jnp.dtype(dtype).itemsize, 8)


def _padded_tile_bytes(rows, cols, dtype):
    """VMEM footprint of a (rows, cols) tile after (sublane, lane) padding."""
    it = jnp.dtype(dtype).itemsize
    return (_round_up(max(rows, 1), _sublane_multiple(dtype))
            * _round_up(max(cols, 1), 128) * it)


def _chip_vmem_bytes():
    """Physical per-core VMEM; conservative default if the query is unavailable."""
    try:
        info = pltpu.get_tpu_info()
        for attr in ("vmem_capacity_bytes", "vmem_bytes", "vmem_size_bytes"):
            v = getattr(info, attr, None)
            if v:
                return int(v)
    except Exception:
        pass
    return 64 * 1024 * 1024   # v7x per-TC VMEM (smallest of the three generations)


# -------------------------------- kernel -------------------------------------

def _anyhead_kernel(x_ref, w_ref, b_ref, o_ref, acc_ref, *,
                    hw_total, block_hw, mask_spatial):
    # x_ref:   (bn, C, bhw)  batch tile, spatial chunk on the lane dim
    # w_ref:   (C, nc)       fc weight^T, pre-scaled by 1/HW (folds the mean)
    # b_ref:   (1, nc)       fc bias (fp32)
    # o_ref:   (bn, nc)
    # acc_ref: (bn, C)       fp32 running spatial sum (scratch, persists over j)
    j = pl.program_id(1)

    @pl.when(j == 0)
    def _init():
        acc_ref[...] = jnp.zeros_like(acc_ref)

    x = x_ref[...].astype(jnp.float32)                       # fp32 pool accumulation
    if mask_spatial:
        lane = jax.lax.broadcasted_iota(jnp.int32, x.shape, x.ndim - 1)
        x = jnp.where(j * block_hw + lane < hw_total, x, 0.0)
    # TODO(synk): on v7x a channels-on-lanes layout (NHWC producer) or an MXU
    # ones-matvec pool would take this cross-lane reduce off the XLU.
    acc_ref[...] += jnp.sum(x, axis=-1)                       # (bn, C)

    @pl.when(j == pl.num_programs(1) - 1)
    def _finish():
        pooled = acc_ref[...].astype(w_ref.dtype)             # matmul compute dtype
        out = jnp.dot(pooled, w_ref[...], preferred_element_type=jnp.float32)
        o_ref[...] = (out + b_ref[...]).astype(o_ref.dtype)


# ------------------------------- tiling ---------------------------------------

def _select_tiling(N, C, HW, x_dtype, budget_bytes):
    it = jnp.dtype(x_dtype).itemsize
    c_pad = _round_up(C, _sublane_multiple(x_dtype))
    hw_pad = _round_up(HW, 128)

    # Batch tile: must be a multiple of 8 or the full batch (output-block rule).
    row_bytes = c_pad * hw_pad * it                           # one padded row, full HW
    if N <= 8:
        block_n = N
    else:
        # keep >= ~4 batch steps AND fit the per-buffer budget
        cand = min(max(1, budget_bytes // row_bytes), -(-N // 4))
        block_n = max(8, (cand // 8) * 8)

    # Spatial tile: a multiple of 128 lanes, or the full extent.
    if block_n * c_pad * hw_pad * it <= budget_bytes:
        block_hw = HW
    else:
        chunks = max(1, budget_bytes // (block_n * c_pad * 128 * it))
        block_hw = min(hw_pad, chunks * 128)
        if block_hw >= HW:
            block_hw = HW

    grid_n = pl.cdiv(N, block_n)
    grid_hw = pl.cdiv(HW, block_hw)

    # Never collapse to a single pipeline step when the spatial dim is splittable:
    # split into 128-lane chunks so DMA/compute overlap (per-step cost ~0.35 us).
    if grid_n * grid_hw < 4 and block_hw == HW and hw_pad >= 2 * 128:
        want = -(-4 // grid_n)
        chunks = min(want, hw_pad // 128)
        block_hw = _round_up(-(-hw_pad // chunks), 128)
        grid_hw = pl.cdiv(HW, block_hw)

    return block_n, block_hw


# ------------------------------- wrapper --------------------------------------

def anyhead_forward(x_nchw, w, b, *, compute_dtype=None,
                    block_n=None, block_hw=None, vmem_bytes_per_buffer=None):
    """AnyHead forward.  x_nchw: (N, C, H, W); w: (nc, w_in) torch layout; b: (nc,).

    compute_dtype: dtype of the fc weight / matmul operands (default: x dtype;
    jnp.bfloat16 recommended for RegNet-scale heads).
    """
    N, C, H, W = x_nchw.shape
    nc = w.shape[0]
    HW = H * W

    x = x_nchw.reshape(N, C, HW)                              # contiguous -> free
    cdt = jnp.dtype(compute_dtype) if compute_dtype is not None else x.dtype
    # Fold the 1/HW mean into the (tiny) weight; transpose to (C, nc).
    w_t = (jnp.transpose(w, (1, 0)).astype(jnp.float32) * (1.0 / HW)).astype(cdt)
    b2 = b.reshape(1, nc).astype(jnp.float32)

    chip_vmem = _chip_vmem_bytes()
    if vmem_bytes_per_buffer is None:
        # Bigger streaming tiles on 128 MiB chips (v5e/v6e); tighter on v7x (64 MiB).
        vmem_bytes_per_buffer = (20 if chip_vmem >= 100 * 1024 * 1024 else 10) * 1024 * 1024

    sel_bn, sel_bhw = _select_tiling(N, C, HW, x.dtype, vmem_bytes_per_buffer)
    block_n = sel_bn if block_n is None else max(1, min(int(block_n), N))
    block_hw = sel_bhw if block_hw is None else max(1, min(int(block_hw), HW))
    grid_n = pl.cdiv(N, block_n)
    grid_hw = pl.cdiv(HW, block_hw)

    # VMEM accounting from the *padded* tiles (weights counted double-buffered as a
    # conservative bound in case the Buffered(1) request is not honored).
    x_it = jnp.dtype(x.dtype).itemsize
    need = (2 * block_n * _padded_tile_bytes(C, block_hw, x.dtype)    # x, 2 buffers
            + 2 * _padded_tile_bytes(C, nc, cdt)                      # weight
            + 2 * _padded_tile_bytes(1, nc, jnp.float32)              # bias
            + 2 * _padded_tile_bytes(block_n, nc, x.dtype)            # output
            + _padded_tile_bytes(block_n, C, jnp.float32))            # accumulator
    vmem_limit = int(min(max(int(need * 1.15) + 2 * 1024 * 1024, 16 * 1024 * 1024),
                         int(chip_vmem * 0.85)))

    cost = pl.CostEstimate(
        flops=int(N * C * HW + 2 * N * C * nc + N * nc),
        transcendentals=0,
        bytes_accessed=int(N * C * HW * x_it + C * nc * jnp.dtype(cdt).itemsize
                           + nc * 4 + N * nc * x_it),
    )

    kernel = functools.partial(
        _anyhead_kernel, hw_total=HW, block_hw=block_hw,
        mask_spatial=(grid_hw * block_hw != HW))

    x_spec = pl.BlockSpec((block_n, C, block_hw), lambda i, j: (i, 0, j))
    out_spec = pl.BlockSpec((block_n, nc), lambda i, j: (i, 0))

    def _call(single_buffer_consts):
        if single_buffer_consts:
            # Grid-invariant operands: no point double-buffering them (saves up to
            # ~10 MB of VMEM for RegNet-scale fp32 weights — critical on v7x).
            w_spec = pl.BlockSpec((C, nc), lambda i, j: (0, 0),
                                  pipeline_mode=pl.Buffered(1))
            b_spec = pl.BlockSpec((1, nc), lambda i, j: (0, 0),
                                  pipeline_mode=pl.Buffered(1))
        else:
            w_spec = pl.BlockSpec((C, nc), lambda i, j: (0, 0))
            b_spec = pl.BlockSpec((1, nc), lambda i, j: (0, 0))
        return pl.pallas_call(
            kernel,
            out_shape=jax.ShapeDtypeStruct((N, nc), x.dtype),
            grid_spec=pltpu.PrefetchScalarGridSpec(
                num_scalar_prefetch=0,
                grid=(grid_n, grid_hw),
                in_specs=[x_spec, w_spec, b_spec],
                out_specs=out_spec,
                scratch_shapes=[pltpu.VMEM((block_n, C), jnp.float32)]),
            compiler_params=pltpu.CompilerParams(
                dimension_semantics=("parallel", "arbitrary"),
                vmem_limit_bytes=vmem_limit),
            cost_estimate=cost,
        )(x, w_t, b2)

    try:
        return _call(True)
    except Exception:
        # Some jax versions reject pl.Buffered(1); default pipelining is still
        # correct (it merely double-buffers the constant weight/bias blocks).
        return _call(False)


# --------------------------------- test ---------------------------------------

if __name__ == "__main__":
    key = jax.random.PRNGKey(0)
    kx, kw, kb, kx2 = jax.random.split(key, 4)

    # Small shapes consistent with the module: batch=2, w_in=4, 16x16 spatial, nc=8.
    N, C, H, W, NC = 2, 4, 16, 16, 8
    x = jax.random.normal(kx, (N, C, H, W), dtype=jnp.float32)
    fc_w = jax.random.normal(kw, (NC, C), dtype=jnp.float32) * 0.1   # torch (nc, w_in)
    fc_b = jax.random.normal(kb, (NC,), dtype=jnp.float32) * 0.1

    out = jax.block_until_ready(anyhead_forward(x, fc_w, fc_b))
    ref = jnp.mean(x, axis=(2, 3)) @ fc_w.T + fc_b
    assert out.shape == (N, NC)
    assert jnp.allclose(out, ref, atol=1e-5, rtol=1e-5), (out, ref)

    # Ragged spatial tiling path (HW=400 -> 128-lane blocks with a masked tail).
    x2 = jax.random.normal(kx2, (N, C, 20, 20), dtype=jnp.float32)
    out2 = jax.block_until_ready(anyhead_forward(x2, fc_w, fc_b))
    ref2 = jnp.mean(x2, axis=(2, 3)) @ fc_w.T + fc_b
    assert jnp.allclose(out2, ref2, atol=1e-5, rtol=1e-5), (out2, ref2)

    # bf16 weight / fast MXU path (fp32 pooling accumulation + fp32 bias retained).
    out3 = jax.block_until_ready(
        anyhead_forward(x, fc_w, fc_b, compute_dtype=jnp.bfloat16))
    assert jnp.allclose(out3, ref, atol=3e-2, rtol=3e-2), (out3, ref)

    print("KERNEL_OK")
</pallas_src>

<mosaic_0001>
module attributes {stable_mosaic.version = 11 : i64} {
  func.func @_anyhead_kernel(%arg0: i32, %arg1: i32, %arg2: memref<2x4x128xf32, #tpu.memory_space<vmem>>, %arg3: memref<4x8xf32, #tpu.memory_space<vmem>>, %arg4: memref<1x8xf32, #tpu.memory_space<vmem>>, %arg5: memref<2x8xf32, #tpu.memory_space<vmem>>, %arg6: memref<2x4xf32, #tpu.memory_space<vmem>>) attributes {dimension_semantics = [#tpu.dimension_semantics<parallel>, #tpu.dimension_semantics<arbitrary>], iteration_bounds = array<i64: 1, 2>, scalar_prefetch = 0 : i64, scratch_operands = 1 : i64, tpu.core_type = #tpu.core_type<tc>, window_params = [{transform_indices = @transform_0, window_bounds = array<i64: 2, 4, 128>}, {pipeline_mode = #tpu.pipeline_mode<synchronous>, transform_indices = @transform_1, window_bounds = array<i64: 4, 8>}, {pipeline_mode = #tpu.pipeline_mode<synchronous>, transform_indices = @transform_2, window_bounds = array<i64: 1, 8>}, {transform_indices = @transform_3, window_bounds = array<i64: 2, 8>}]} {
    %c0_i32 = arith.constant 0 : i32
    %0 = arith.cmpi eq, %arg1, %c0_i32 : i32
    %1 = arith.extui %0 : i1 to i32
    %c0_i32_0 = arith.constant 0 : i32
    %2 = arith.cmpi ne, %1, %c0_i32_0 : i32
    scf.if %2 {
      %cst_8 = arith.constant 0.000000e+00 : f32
      %11 = vector.broadcast %cst_8 : f32 to vector<2x4xf32>
      %c0_9 = arith.constant 0 : index
      %c0_10 = arith.constant 0 : index
      %12 = vector.load %arg6[%c0_9, %c0_10] : memref<2x4xf32, #tpu.memory_space<vmem>>, vector<2x4xf32>
      tpu.vector_store %arg6[%c0_9, %c0_10], %11 {strides = array<i32>} : memref<2x4xf32, #tpu.memory_space<vmem>>, vector<2x4xf32>,
    } else {
    }
    %c0 = arith.constant 0 : index
    %c0_1 = arith.constant 0 : index
    %c0_2 = arith.constant 0 : index
    %3 = vector.load %arg2[%c0, %c0_1, %c0_2] : memref<2x4x128xf32, #tpu.memory_space<vmem>>, vector<2x4x128xf32>
    %c0_3 = arith.constant 0 : index
    %c0_4 = arith.constant 0 : index
    %4 = vector.load %arg6[%c0_3, %c0_4] : memref<2x4xf32, #tpu.memory_space<vmem>>, vector<2x4xf32>
    %cst = arith.constant dense<0.000000e+00> : vector<2x4xf32>
    %5 = vector.multi_reduction <add>, %3, %cst [2] : vector<2x4x128xf32> to vector<2x4xf32>
    %6 = arith.addf %4, %5 : vector<2x4xf32>
    %c0_5 = arith.constant 0 : index
    %c0_6 = arith.constant 0 : index
    %7 = vector.load %arg6[%c0_5, %c0_6] : memref<2x4xf32, #tpu.memory_space<vmem>>, vector<2x4xf32>
    tpu.vector_store %arg6[%c0_5, %c0_6], %6 {strides = array<i32>} : memref<2x4xf32, #tpu.memory_space<vmem>>, vector<2x4xf32>,
    %c1_i32 = arith.constant 1 : i32
    %8 = arith.cmpi eq, %arg1, %c1_i32 : i32
    %9 = arith.extui %8 : i1 to i32
    %c0_i32_7 = arith.constant 0 : i32
    %10 = arith.cmpi ne, %9, %c0_i32_7 : i32
    scf.if %10 {
      %c0_8 = arith.constant 0 : index
      %c0_9 = arith.constant 0 : index
      %11 = vector.load %arg6[%c0_8, %c0_9] : memref<2x4xf32, #tpu.memory_space<vmem>>, vector<2x4xf32>
      %c0_10 = arith.constant 0 : index
      %c0_11 = arith.constant 0 : index
      %12 = vector.load %arg3[%c0_10, %c0_11] : memref<4x8xf32, #tpu.memory_space<vmem>>, vector<4x8xf32>
      %cst_12 = arith.constant dense<0.000000e+00> : vector<2x8xf32>
      %13 = tpu.matmul %11, %12, %cst_12 {dimension_numbers = #tpu.dot_dimension_numbers<[1], [0], [0], [1], [0, 0, 1, 1], [], []>} : vector<2x4xf32>, vector<4x8xf32>, vector<2x8xf32> -> vector<2x8xf32>
      %c0_13 = arith.constant 0 : index
      %c0_14 = arith.constant 0 : index
      %14 = vector.load %arg4[%c0_13, %c0_14] : memref<1x8xf32, #tpu.memory_space<vmem>>, vector<1x8xf32>
      %15 = vector.broadcast %14 : vector<1x8xf32> to vector<2x8xf32>
      %16 = arith.addf %13, %15 : vector<2x8xf32>
      %c0_15 = arith.constant 0 : index
      %c0_16 = arith.constant 0 : index
      %17 = vector.load %arg5[%c0_15, %c0_16] : memref<2x8xf32, #tpu.memory_space<vmem>>, vector<2x8xf32>
      tpu.vector_store %arg5[%c0_15, %c0_16], %16 {strides = array<i32>} : memref<2x8xf32, #tpu.memory_space<vmem>>, vector<2x8xf32>,
    } else {
    }
    return
  }
  func.func @transform_0(%arg0: i32, %arg1: i32) -> (i32, i32, i32) {
    %c0_i32 = arith.constant 0 : i32
    %c0_i32_0 = arith.constant 0 : i32
    return %arg0, %c0_i32, %arg1 : i32, i32, i32
  }
  func.func @transform_1(%arg0: i32, %arg1: i32) -> (i32, i32) {
    %c0_i32 = arith.constant 0 : i32
    %c0_i32_0 = arith.constant 0 : i32
    %c0_i32_1 = arith.constant 0 : i32
    return %c0_i32, %c0_i32_0 : i32, i32
  }
  func.func @transform_2(%arg0: i32, %arg1: i32) -> (i32, i32) {
    %c0_i32 = arith.constant 0 : i32
    %c0_i32_0 = arith.constant 0 : i32
    %c0_i32_1 = arith.constant 0 : i32
    return %c0_i32, %c0_i32_0 : i32, i32
  }
  func.func @transform_3(%arg0: i32, %arg1: i32) -> (i32, i32) {
    %c0_i32 = arith.constant 0 : i32
    %c0_i32_0 = arith.constant 0 : i32
    return %arg0, %c0_i32 : i32, i32
  }
}

module attributes {stable_mosaic.version = 11 : i64} {
  func.func @_anyhead_kernel(%arg0: i32, %arg1: i32, %arg2: memref<2x4x128xf32, #tpu.memory_space<vmem>>, %arg3: memref<4x8xf32, #tpu.memory_space<vmem>>, %arg4: memref<1x8xf32, #tpu.memory_space<vmem>>, %arg5: memref<2x8xf32, #tpu.memory_space<vmem>>, %arg6: memref<2x4xf32, #tpu.memory_space<vmem>>) attributes {dimension_semantics = [#tpu.dimension_semantics<parallel>, #tpu.dimension_semantics<arbitrary>], iteration_bounds = array<i64: 1, 2>, scalar_prefetch = 0 : i64, scratch_operands = 1 : i64, tpu.core_type = #tpu.core_type<tc>, window_params = [{transform_indices = @transform_0, window_bounds = array<i64: 2, 4, 128>}, {pipeline_mode = #tpu.pipeline_mode<synchronous>, transform_indices = @transform_1, window_bounds = array<i64: 4, 8>}, {pipeline_mode = #tpu.pipeline_mode<synchronous>, transform_indices = @transform_2, window_bounds = array<i64: 1, 8>}, {transform_indices = @transform_3, window_bounds = array<i64: 2, 8>}]} {
    %c0_i32 = arith.constant 0 : i32
    %0 = arith.cmpi eq, %arg1, %c0_i32 : i32
    %1 = arith.extui %0 : i1 to i32
    %c0_i32_0 = arith.constant 0 : i32
    %2 = arith.cmpi ne, %1, %c0_i32_0 : i32
    scf.if %2 {
      %cst_8 = arith.constant 0.000000e+00 : f32
      %11 = vector.broadcast %cst_8 : f32 to vector<2x4xf32>
      %c0_9 = arith.constant 0 : index
      %c0_10 = arith.constant 0 : index
      %12 = vector.load %arg6[%c0_9, %c0_10] : memref<2x4xf32, #tpu.memory_space<vmem>>, vector<2x4xf32>
      tpu.vector_store %arg6[%c0_9, %c0_10], %11 {strides = array<i32>} : memref<2x4xf32, #tpu.memory_space<vmem>>, vector<2x4xf32>,
    } else {
    }
    %c0 = arith.constant 0 : index
    %c0_1 = arith.constant 0 : index
    %c0_2 = arith.constant 0 : index
    %3 = vector.load %arg2[%c0, %c0_1, %c0_2] : memref<2x4x128xf32, #tpu.memory_space<vmem>>, vector<2x4x128xf32>
    %c0_3 = arith.constant 0 : index
    %c0_4 = arith.constant 0 : index
    %4 = vector.load %arg6[%c0_3, %c0_4] : memref<2x4xf32, #tpu.memory_space<vmem>>, vector<2x4xf32>
    %cst = arith.constant dense<0.000000e+00> : vector<2x4xf32>
    %5 = vector.multi_reduction <add>, %3, %cst [2] : vector<2x4x128xf32> to vector<2x4xf32>
    %6 = arith.addf %4, %5 : vector<2x4xf32>
    %c0_5 = arith.constant 0 : index
    %c0_6 = arith.constant 0 : index
    %7 = vector.load %arg6[%c0_5, %c0_6] : memref<2x4xf32, #tpu.memory_space<vmem>>, vector<2x4xf32>
    tpu.vector_store %arg6[%c0_5, %c0_6], %6 {strides = array<i32>} : memref<2x4xf32, #tpu.memory_space<vmem>>, vector<2x4xf32>,
    %c1_i32 = arith.constant 1 : i32
    %8 = arith.cmpi eq, %arg1, %c1_i32 : i32
    %9 = arith.extui %8 : i1 to i32
    %c0_i32_7 = arith.constant 0 : i32
    %10 = arith.cmpi ne, %9, %c0_i32_7 : i32
    scf.if %10 {
      %c0_8 = arith.constant 0 : index
      %c0_9 = arith.constant 0 : index
      %11 = vector.load %arg6[%c0_8, %c0_9] : memref<2x4xf32, #tpu.memory_space<vmem>>, vector<2x4xf32>
      %c0_10 = arith.constant 0 : index
      %c0_11 = arith.constant 0 : index
      %12 = vector.load %arg3[%c0_10, %c0_11] : memref<4x8xf32, #tpu.memory_space<vmem>>, vector<4x8xf32>
      %cst_12 = arith.constant dense<0.000000e+00> : vector<2x8xf32>
      %13 = tpu.matmul %11, %12, %cst_12 {dimension_numbers = #tpu.dot_dimension_numbers<[1], [0], [0], [1], [0, 0, 1, 1], [], []>} : vector<2x4xf32>, vector<4x8xf32>, vector<2x8xf32> -> vector<2x8xf32>
      %c0_13 = arith.constant 0 : index
      %c0_14 = arith.constant 0 : index
      %14 = vector.load %arg4[%c0_13, %c0_14] : memref<1x8xf32, #tpu.memory_space<vmem>>, vector<1x8xf32>
      %15 = vector.broadcast %14 : vector<1x8xf32> to vector<2x8xf32>
      %16 = arith.addf %13, %15 : vector<2x8xf32>
      %c0_15 = arith.constant 0 : index
      %c0_16 = arith.constant 0 : index
      %17 = vector.load %arg5[%c0_15, %c0_16] : memref<2x8xf32, #tpu.memory_space<vmem>>, vector<2x8xf32>
      tpu.vector_store %arg5[%c0_15, %c0_16], %16 {strides = array<i32>} : memref<2x8xf32, #tpu.memory_space<vmem>>, vector<2x8xf32>,
    } else {
    }
    return
  }
  func.func @transform_0(%arg0: i32, %arg1: i32) -> (i32, i32, i32) {
    %c0_i32 = arith.constant 0 : i32
    %c0_i32_0 = arith.constant 0 : i32
    return %arg0, %c0_i32, %arg1 : i32, i32, i32
  }
  func.func @transform_1(%arg0: i32, %arg1: i32) -> (i32, i32) {
    %c0_i32 = arith.constant 0 : i32
    %c0_i32_0 = arith.constant 0 : i32
    %c0_i32_1 = arith.constant 0 : i32
    return %c0_i32, %c0_i32_0 : i32, i32
  }
  func.func @transform_2(%arg0: i32, %arg1: i32) -> (i32, i32) {
    %c0_i32 = arith.constant 0 : i32
    %c0_i32_0 = arith.constant 0 : i32
    %c0_i32_1 = arith.constant 0 : i32
    return %c0_i32, %c0_i32_0 : i32, i32
  }
  func.func @transform_3(%arg0: i32, %arg1: i32) -> (i32, i32) {
    %c0_i32 = arith.constant 0 : i32
    %c0_i32_0 = arith.constant 0 : i32
    return %arg0, %c0_i32 : i32, i32
  }
}

</mosaic_0001>

<llo_original>
// kernel: tpu_custom_call.1
$region0: #{tpu_custom_call.1}
  #allocation0 [shape = 'u32[]', space=smem, size = 0x4, offset = 0x4, fixed_abs, tag = 'smem constant byte address 0x4 - core index']
  #allocation1 [shape = 'u32[144,128]{1,0:T(1,128)}', space=vmem, size = 0x12000, scoped, tag = 'internal scratch']
  #allocation2 [shape = 'f32[2,4]{1,0:T(2,128)}', space=vmem, size = 0x400, scoped, tag = 'scratch operand']
  %s0 = inlined_call_operand.hbm [shape: f32[2,4,256], index: 0, kind: input, shape index: {}]
  %s1 = inlined_call_operand.hbm [shape: f32[4,8], index: 1, kind: input, shape index: {}]
  %s2 = inlined_call_operand.vmem [shape: f32[1,8], index: 2, kind: input, shape index: {}]
  %s3 = inlined_call_operand.hbm [shape: f32[2,8], index: 3, kind: output, shape index: {}]
  %s4 = sld [smem:[#allocation0]]
  $region61: #{tpu_custom_call.1} parent=0
    _
  %s6 = ssub.s32 1, %s4
  %s7 = scalar_select 0, %s6, %s4
  $region1: #{tpu_custom_call.1} parent=0
    #allocation3 [shape = 'u8[8192]{0}', space=vmem, size = 0x2000, scoped, tag = 'input window, operand 0']
    #allocation4 [shape = 's32[2]{0}', space=sflag, size = 0x8, scoped, tag = 'scoped memory for tpu_custom_call.1']
    #allocation5 [shape = 's32[2]{0}', space=sflag, size = 0x8, scoped, tag = 'scoped memory for tpu_custom_call.1']
    #allocation6 [shape = 'u8[2048]{0}', space=vmem, size = 0x800, scoped, tag = 'input window, operand 1, single buffered']
    #allocation7 [shape = 's32[1]{0}', space=sflag, size = 0x4, scoped, tag = 'scoped memory for tpu_custom_call.1']
    #allocation8 [shape = 'u8[1024]{0}', space=vmem, size = 0x400, scoped, tag = 'output window, operand 0, single buffered']
    %8 = vsyncpa [#allocation4], 0
    %s9 = scalar_lea.sflag [#allocation4], 1
    %10 = vsyncpa %s9, 0
    %11 = vsyncpa [#allocation7], 0
    %12 = vsyncpa [#allocation5], 0
    loop: start=0, step=1, limit=4
    $region2: #{tpu_custom_call.1} parent=1 // loop_pre_header
      _
    $region3: #{tpu_custom_call.1} parent=1 // loop_header
      %s14 = sphi 0, %s18
      %p15 = scmp.ge.s32.totalorder %s14, 4
      %s21 = sphi 0, %s33
      %s22 = sphi 0, %s29
      %s23 = sphi 0, %s21
      %s24 = sphi 0, %s22
      %s25 = sphi 0, %s23
      %s26 = sphi 0, %s24
      %s38 = sphi 0, %s40
      %s41 = sphi 0, %s38
      %s42 = sphi 0, %s41
      %s58 = sphi 0, %s42
      %s62 = sphi 0, %s62
      %s64 = sphi 0, %s62
      %s65 = sphi 0, %s64
      %s79 = sphi 0, %s65
      %s83 = sphi 0, %s83
      %s85 = sphi 0, %s83
      %s86 = sphi 0, %s85
      %s100 = sphi 0, %s86
      %s106 = sphi 0, %s108
      %s109 = sphi 0, %s106
      %s110 = sphi 0, %s109
      %s126 = sphi 0, %s110
    $region4: #{tpu_custom_call.1} parent=1 // loop_header_branch
      %17 = sbr.rel (%p15) target = $region8
    $region5: #{tpu_custom_call.1} parent=1 // loop_body
      %s19 = ssub.s32 %s14, 1
      %s20 = ssub.s32 %s14, 2
      %s27 = sadd.s32 1, %s22
      %p28 = scmp.ge.s32.totalorder %s27, 2
      %s29 = scalar_select %p28, 0, %s27
      %s30 = sadd.s32 1, %s21
      %s31 = scalar_select %p28, %s30, %s21
      %p32 = scmp.ge.s32.totalorder %s31, 1
      %s33 = scalar_select %p32, 0, %s31
      %s34 = ssub.s32 %s21, %s33
      %s35 = ssub.s32 %s22, %s29
      %s36 = sor.u32 %s34, %s35
      %p37 = scmp.eq.s32.totalorder %s36, 0
      %s39 = sadd.s32 %s38, 1
      %s40 = scalar_select %p37, %s38, %s39
      %p43 = pneg %p37
      %p44 = scmp.eq.s32.totalorder %s14, 1
      %p45 = por %p43, %p44
      %p46 = scmp.ne.s32.totalorder %s38, %s41
      %p47 = scmp.eq.s32.totalorder %s14, 0
      %p48 = por %p46, %p47
      %p49 = scmp.ne.s32.totalorder %s38, %s41
      %p50 = scmp.eq.s32.totalorder %s19, 1
      %p51 = por %p49, %p50
      %p52 = scmp.ne.s32.totalorder %s41, %s42
      %p53 = scmp.eq.s32.totalorder %s19, 0
      %p54 = por %p52, %p53
      %p55 = scmp.ne.s32.totalorder %s41, %s42
      %p56 = scmp.eq.s32.totalorder %s20, 1
      %p57 = por %p55, %p56
      %p59 = scmp.ne.s32.totalorder %s42, %s58
      %p60 = scmp.eq.s32.totalorder %s20, 0
      %p61 = por %p59, %p60
      %s63 = sadd.s32 %s62, 1
      %p66 = scmp.eq.s32.totalorder %s14, 1
      %p67 = scmp.ne.s32.totalorder %s62, %s64
      %p68 = scmp.eq.s32.totalorder %s14, 0
      %p69 = por %p67, %p68
      %p70 = scmp.ne.s32.totalorder %s62, %s64
      %p71 = scmp.eq.s32.totalorder %s19, 1
      %p72 = por %p70, %p71
      %p73 = scmp.ne.s32.totalorder %s64, %s65
      %p74 = scmp.eq.s32.totalorder %s19, 0
      %p75 = por %p73, %p74
      %p76 = scmp.ne.s32.totalorder %s64, %s65
      %p77 = scmp.eq.s32.totalorder %s20, 1
      %p78 = por %p76, %p77
      %p80 = scmp.ne.s32.totalorder %s65, %s79
      %p81 = scmp.eq.s32.totalorder %s20, 0
      %p82 = por %p80, %p81
      %s84 = sadd.s32 %s83, 1
      %p87 = scmp.eq.s32.totalorder %s14, 1
      %p88 = scmp.ne.s32.totalorder %s83, %s85
      %p89 = scmp.eq.s32.totalorder %s14, 0
      %p90 = por %p88, %p89
      %p91 = scmp.ne.s32.totalorder %s83, %s85
      %p92 = scmp.eq.s32.totalorder %s19, 1
      %p93 = por %p91, %p92
      %p94 = scmp.ne.s32.totalorder %s85, %s86
      %p95 = scmp.eq.s32.totalorder %s19, 0
      %p96 = por %p94, %p95
      %p97 = scmp.ne.s32.totalorder %s85, %s86
      %p98 = scmp.eq.s32.totalorder %s20, 1
      %p99 = por %p97, %p98
      %p101 = scmp.ne.s32.totalorder %s86, %s100
      %p102 = scmp.eq.s32.totalorder %s20, 0
      %p103 = por %p101, %p102
      %s104 = ssub.s32 %s21, %s33
      %p105 = scmp.eq.s32.totalorder %s104, 0
      %s107 = sadd.s32 %s106, 1
      %s108 = scalar_select %p105, %s106, %s107
      %p111 = pneg %p105
      %p112 = scmp.eq.s32.totalorder %s14, 1
      %p113 = por %p111, %p112
      %p114 = scmp.ne.s32.totalorder %s106, %s109
      %p115 = scmp.eq.s32.totalorder %s14, 0
      %p116 = por %p114, %p115
      %p117 = scmp.ne.s32.totalorder %s106, %s109
      %p118 = scmp.eq.s32.totalorder %s19, 1
      %p119 = por %p117, %p118
      %p120 = scmp.ne.s32.totalorder %s109, %s110
      %p121 = scmp.eq.s32.totalorder %s19, 0
      %p122 = por %p120, %p121
      %p123 = scmp.ne.s32.totalorder %s109, %s110
      %p124 = scmp.eq.s32.totalorder %s20, 1
      %p125 = por %p123, %p124
      %p127 = scmp.ne.s32.totalorder %s110, %s126
      %p128 = scmp.eq.s32.totalorder %s20, 0
      %p129 = por %p127, %p128
      %p130 = scmp.le.s32.totalorder 1, %s14
      %p131 = scmp.lt.s32.totalorder %s14, 3
      %p132 = pnand %p130, %p131
      %p133 = pneg %p132
      // Predicated region
      $region9: #{tpu_custom_call.1} parent=5 // pred_check
        _
      $region10: #{tpu_custom_call.1} parent=5 // pred_check_branch
        %135 = sbr.rel (%p132) target = $region12
      $region11: #{tpu_custom_call.1} parent=5 // pred_region
        %s136 = ssub.s32 %s14, 1
        // Predicated region
        $region13: #{tpu_custom_call.1} parent=11 // pred_check
          %p137 = pneg %p75
        $region14: #{tpu_custom_call.1} parent=11 // pred_check_branch
          %139 = sbr.rel (%p137) target = $region16
        $region15: #{tpu_custom_call.1} parent=11 // pred_region
          %s141 = ssub.s32 64, 64
          %142 = vsyncadd [#allocation7], %s141
          %s144 = sshll.u32 [#allocation6], 4
          %s145 = int_to_ptr.vmem [resolvable:$true] %s144
          %147 = dma.hbm_to_vmem [thread:$0]  %s1, 64, %s145, [#allocation7]
        $region16: #{tpu_custom_call.1} parent=11 // pred_fallthru
          _
        // Predicated region
        $region17: #{tpu_custom_call.1} parent=11 // pred_check
          %p148 = pneg %p96
        $region18: #{tpu_custom_call.1} parent=11 // pred_check_branch
          %150 = sbr.rel (%p148) target = $region20
        $region19: #{tpu_custom_call.1} parent=11 // pred_region
          _
        $region20: #{tpu_custom_call.1} parent=11 // pred_fallthru
          _
      $region12: #{tpu_custom_call.1} parent=5 // pred_fallthru
        _
      %p151 = scmp.lt.s32.totalorder %s14, 2
      // Predicated region
      $region21: #{tpu_custom_call.1} parent=5 // pred_check
        %p152 = pneg %p151
      $region22: #{tpu_custom_call.1} parent=5 // pred_check_branch
        %154 = sbr.rel (%p152) target = $region24
      $region23: #{tpu_custom_call.1} parent=5 // pred_region
        // Predicated region
        $region25: #{tpu_custom_call.1} parent=23 // pred_check
          %p155 = pneg %p48
        $region26: #{tpu_custom_call.1} parent=23 // pred_check_branch
          %157 = sbr.rel (%p155) target = $region28
        $region27: #{tpu_custom_call.1} parent=23 // pred_region
          %s158 = sand.u32 %s38, 1
          %s159 = scalar_lea.sflag [#allocation4], %s158
          %s160 = sand.u32 %s38, 1
          %s161 = smul.addr %s160, 8
          %s162 = scalar_lea.vmem [#allocation3], %s161
          %s163 = smul.u32 2, %s21
          %s165 = ssub.s32 128, 128
          %166 = vsyncadd %s159, %s165
          %s167 = smul.addr %s163, 2
          %s168 = sadd.s32 %s22, %s167
          %s169 = smul.addr %s168, 64
          %s170 = scalar_lea.hbm %s0, %s169
          %s171 = sshll.u32 %s162, 4
          %s172 = int_to_ptr.vmem [resolvable:$true] %s171
          %177 = dma.hbm_to_vmem [thread:$0]  %s170, 128, %s172, %s159, 128, 64, 4
        $region28: #{tpu_custom_call.1} parent=23 // pred_fallthru
          _
      $region24: #{tpu_custom_call.1} parent=5 // pred_fallthru
        _
      %p178 = scmp.le.s32.totalorder 1, %s14
      %p179 = scmp.lt.s32.totalorder %s14, 3
      %p180 = pnand %p178, %p179
      %p181 = pneg %p180
      // Predicated region
      $region29: #{tpu_custom_call.1} parent=5 // pred_check
        _
      $region30: #{tpu_custom_call.1} parent=5 // pred_check_branch
        %183 = sbr.rel (%p180) target = $region32
      $region31: #{tpu_custom_call.1} parent=5 // pred_region
        %s184 = ssub.s32 %s14, 1
        %s185 = sand.u32 %s41, 1
        %s186 = scalar_lea.sflag [#allocation4], %s185
        %s187 = sand.u32 %s41, 1
        %s188 = smul.addr %s187, 8
        %s189 = scalar_lea.vmem [#allocation3], %s188
        // Predicated region
        $region33: #{tpu_custom_call.1} parent=31 // pred_check
          %p190 = pneg %p54
        $region34: #{tpu_custom_call.1} parent=31 // pred_check_branch
          %192 = sbr.rel (%p190) target = $region36
        $region35: #{tpu_custom_call.1} parent=31 // pred_region
          %193 = dma.done %s186, 128
        $region36: #{tpu_custom_call.1} parent=31 // pred_fallthru
          _
        // Predicated region
        $region37: #{tpu_custom_call.1} parent=31 // pred_check
          %p194 = pneg %p75
        $region38: #{tpu_custom_call.1} parent=31 // pred_check_branch
          %196 = sbr.rel (%p194) target = $region40
        $region39: #{tpu_custom_call.1} parent=31 // pred_region
          %197 = dma.done [#allocation7], 64
        $region40: #{tpu_custom_call.1} parent=31 // pred_fallthru
          _
        %s198 = sand.u32 %s41, 1
        %s199 = scalar_lea.sflag [#allocation4], %s198
        %s200 = sand.u32 %s41, 1
        %s201 = smul.addr %s200, 8
        %s202 = scalar_lea.vmem [#allocation3], %s201
        %p203 = pneg %p54
        %p204 = pneg %p51
        %p205 = pneg %p75
        %p206 = pneg %p72
        %p207 = pneg %p96
        %p208 = pneg %p93
        %p209 = pneg %p122
        %p210 = pneg %p119
        %s211 = smul.u32 2, %s23
        %p212 = scmp.eq.s32.totalorder %s24, 0
        // Predicated region
        $region41: #{tpu_custom_call.1} parent=31 // pred_check
          %p213 = pneg %p212
        $region42: #{tpu_custom_call.1} parent=31 // pred_check_branch
          %215 = sbr.rel (%p213) target = $region44
        $region43: #{tpu_custom_call.1} parent=31 // pred_region
          %vm216 = vcmask 25600
          %217 = vst.msk [vmem:[#allocation2] sm:$0x3] %vm216, 0.0
        $region44: #{tpu_custom_call.1} parent=31 // pred_fallthru
          _
        %v218 = vld [vmem:[%s189] sm:$0xf]
        %v219 = vld [vmem:[%s189 + $0x4] sm:$0xf]
        %v220 = vld [vmem:[#allocation2] sm:$0x3]
        %vm221 = vcmask 1043456
        %v222 = vsel %vm221, %v218, 0.0
        %223 = vadd.xlane.f32.xlu0 %v222
        %v224 = vpop.xlane.xlu0 %223
        %v225 = vsel %vm221, %v219, 0.0
        %226 = vadd.xlane.f32.xlu0 %v225
        %v227 = vpop.xlane.xlu0 %226
        %v230 = vlaneseq
        %v231 = vand.u32 %v230, 127
        %v232 = vlaneseq
        %v233 = vshrl.u32 %v232, 7
        %v234 = vsub.s32 %v231, %v233
        %v235 = vrot.slane %v224, %v234
        %v236 = vlaneseq
        %v237 = vshrl.u32 %v236, 7
        %v238 = vsub.s32 %v231, %v237
        %v239 = vrot.slane %v227, %v238
        %vm240 = vcmask 1041409
        %v241 = vsel %vm240, %v239, %v235
        %v243 = vadd.f32 %v220, %v241
        %vm244 = vcmask 25600
        %245 = vst.msk [vmem:[#allocation2] sm:$0x3] %vm244, %v243
        %p246 = scmp.eq.s32.totalorder %s24, 1
        // Predicated region
        $region45: #{tpu_custom_call.1} parent=31 // pred_check
          %p247 = pneg %p246
        $region46: #{tpu_custom_call.1} parent=31 // pred_check_branch
          %249 = sbr.rel (%p247) target = $region48
        $region47: #{tpu_custom_call.1} parent=31 // pred_region
          %v250 = vld [vmem:[#allocation2] sm:$0x3]
          %v251 = vld [vmem:[#allocation6] sm:$0xf]
          %v252 = vld [vmem:[%s2] sm:$0x1]
          %v254 = vlaneseq
          %v255 = vshrl.u32 %v254, 7
          %v256 = vsub.s32 0, %v255
          %v257 = vrot.slane %v252, %v256
          %vm259 = vcmask 31744
          %v261 = vsel %vm259, %v250, 0
          %v264 = vsel %vm221, %v251, 0
          %266 = vmatprep.subr.mxu0 0.0
          %267 = vmatpush1.msra.mxu0 0.0
          %268 = vmatprep.subr.mxu0 0.0
          %269 = vmatpush1.msra.mxu0 0.0
          %270 = vmatprep.subr.mxu0 0.0
          %271 = vmatpush1.msra.mxu0 0.0
          %272 = vmatprep.subr.mxu0 0.0
          %273 = vmatpush1.msra.mxu0 0.0
          %274 = vmatprep.subr.mxu0 0.0
          %275 = vmatpush1.msra.mxu0 0.0
          %276 = vmatprep.subr.mxu0 0.0
          %277 = vmatpush1.msra.mxu0 0.0
          %278 = vmatprep.subr.mxu0 0.0
          %279 = vmatpush1.msra.mxu0 0.0
          %280 = vmatprep.subr.mxu0 0.0
          %281 = vmatpush1.msra.mxu0 0.0
          %282 = vmatprep.subr.mxu0 0.0
          %283 = vmatpush1.msra.mxu0 0.0
          %284 = vmatprep.subr.mxu0 0.0
          %285 = vmatpush1.msra.mxu0 0.0
          %286 = vmatprep.subr.mxu0 0.0
          %287 = vmatpush1.msra.mxu0 0.0
          %288 = vmatprep.subr.mxu0 0.0
          %289 = vmatpush1.msra.mxu0 0.0
          %290 = vmatprep.subr.mxu0 0.0
          %291 = vmatpush1.msra.mxu0 0.0
          %292 = vmatprep.subr.mxu0 0.0
          %293 = vmatpush1.msra.mxu0 0.0
          %294 = vmatprep.subr.mxu0 0.0
          %295 = vmatpush1.msra.mxu0 0.0
          %296 = vmatprep.subr.mxu0 0.0
          %297 = vmatpush1.msra.mxu0 %v264
          %298 = vmatprep.subr.mxu0 0.0
          %299 = vmatpush2.msra.mxu0 0.0
          %300 = vmatprep.subr.mxu0 0.0
          %301 = vmatpush2.msra.mxu0 0.0
          %302 = vmatprep.subr.mxu0 0.0
          %303 = vmatpush2.msra.mxu0 0.0
          %304 = vmatprep.subr.mxu0 0.0
          %305 = vmatpush2.msra.mxu0 0.0
          %306 = vmatprep.subr.mxu0 0.0
          %307 = vmatpush2.msra.mxu0 0.0
          %308 = vmatprep.subr.mxu0 0.0
          %309 = vmatpush2.msra.mxu0 0.0
          %310 = vmatprep.subr.mxu0 0.0
          %311 = vmatpush2.msra.mxu0 0.0
          %312 = vmatprep.subr.mxu0 0.0
          %313 = vmatpush2.msra.mxu0 0.0
          %314 = vmatprep.subr.mxu0 0.0
          %315 = vmatpush2.msra.mxu0 0.0
          %316 = vmatprep.subr.mxu0 0.0
          %317 = vmatpush2.msra.mxu0 0.0
          %318 = vmatprep.subr.mxu0 0.0
          %319 = vmatpush2.msra.mxu0 0.0
          %320 = vmatprep.subr.mxu0 0.0
          %321 = vmatpush2.msra.mxu0 0.0
          %322 = vmatprep.subr.mxu0 0.0
          %323 = vmatpush2.msra.mxu0 0.0
          %324 = vmatprep.subr.mxu0 0.0
          %325 = vmatpush2.msra.mxu0 0.0
          %326 = vmatprep.subr.mxu0 0.0
          %327 = vmatpush2.msra.mxu0 0.0
          %328 = vmatprep.subr.mxu0 0.0
          %329 = vmatpush2.msra.mxu0 0.0
          %330 = vmatprep.mubr.f32.mxu0 0.0
          %331 = vmatmul.mubr.f32.gmra.mxu0 %v261
          %v332 = vpop.f32.mrf.mxu0
          %v333 = vadd.f32 %v257, %v332
          %v334 = vpop.f32.mrf.mxu0
          %335 = vdwg.mxu0
          %vm336 = vcmask 58368
          %337 = vst.msk [vmem:[#allocation8] sm:$0x3] %vm336, %v333
        $region48: #{tpu_custom_call.1} parent=31 // pred_fallthru
          _
        // Predicated region
        $region49: #{tpu_custom_call.1} parent=31 // pred_check
          %p338 = pneg %p119
        $region50: #{tpu_custom_call.1} parent=31 // pred_check_branch
          %340 = sbr.rel (%p338) target = $region52
        $region51: #{tpu_custom_call.1} parent=31 // pred_region
          %s342 = ssub.s32 32, 32
          %343 = vsyncadd [#allocation5], %s342
          %s344 = smul.addr %s23, 32
          %s345 = scalar_lea.hbm %s3, %s344
          %s347 = sshll.u32 [#allocation8], 4
          %s348 = int_to_ptr.vmem [resolvable:$true] %s347
          %350 = dma.vmem_to_hbm [thread:$0]  %s348, 32, %s345, [#allocation5]
        $region52: #{tpu_custom_call.1} parent=31 // pred_fallthru
          _
        // Predicated region
        $region53: #{tpu_custom_call.1} parent=31 // pred_check
          %p351 = pneg %p119
        $region54: #{tpu_custom_call.1} parent=31 // pred_check_branch
          %353 = sbr.rel (%p351) target = $region56
        $region55: #{tpu_custom_call.1} parent=31 // pred_region
          %354 = dma.done [#allocation5], 32
        $region56: #{tpu_custom_call.1} parent=31 // pred_fallthru
          _
      $region32: #{tpu_custom_call.1} parent=5 // pred_fallthru
        _
      %p355 = scmp.le.s32.totalorder 2, %s14
      // Predicated region
      $region57: #{tpu_custom_call.1} parent=5 // pred_check
        %p356 = pneg %p355
      $region58: #{tpu_custom_call.1} parent=5 // pred_check_branch
        %358 = sbr.rel (%p356) target = $region60
      $region59: #{tpu_custom_call.1} parent=5 // pred_region
        %s359 = ssub.s32 %s14, 2
      $region60: #{tpu_custom_call.1} parent=5 // pred_fallthru
        _
    $region6: #{tpu_custom_call.1} parent=1 // loop_footer
      %s18 = sadd.s32 1, %s14
    $region7: #{tpu_custom_call.1} parent=1 // loop_footer_branch
      %13 = sbr.rel target = $region3
    $region8: #{tpu_custom_call.1} parent=1 // loop_exit
      _
    %360 = vsyncpa [#allocation4], 1
    %s361 = scalar_lea.sflag [#allocation4], 1
    %362 = vsyncpa %s361, 1
    %363 = vsyncpa [#allocation7], 1
    %364 = vsyncpa [#allocation5], 1
    %s365 = scalar_lea.sflag [#allocation5], 1
    %366 = vsyncpa %s365, 1

// kernel: tpu_custom_call.1
$region0: #{tpu_custom_call.1}
  #allocation0 [shape = 'u32[]', space=smem, size = 0x4, offset = 0x4, fixed_abs, tag = 'smem constant byte address 0x4 - core index']
  #allocation1 [shape = 'u32[144,128]{1,0:T(1,128)}', space=vmem, size = 0x12000, scoped, tag = 'internal scratch']
  #allocation2 [shape = 'f32[2,4]{1,0:T(2,128)}', space=vmem, size = 0x400, scoped, tag = 'scratch operand']
  %s0 = inlined_call_operand.hbm [shape: f32[2,4,256], index: 0, kind: input, shape index: {}]
  %s1 = inlined_call_operand.hbm [shape: f32[4,8], index: 1, kind: input, shape index: {}]
  %s2 = inlined_call_operand.vmem [shape: f32[1,8], index: 2, kind: input, shape index: {}]
  %s3 = inlined_call_operand.hbm [shape: f32[2,8], index: 3, kind: output, shape index: {}]
  %s4 = sld [smem:[#allocation0]]
  $region61: #{tpu_custom_call.1} parent=0
    _
  %s6 = ssub.s32 1, %s4
  %s7 = scalar_select 0, %s6, %s4
  $region1: #{tpu_custom_call.1} parent=0
    #allocation3 [shape = 'u8[8192]{0}', space=vmem, size = 0x2000, scoped, tag = 'input window, operand 0']
    #allocation4 [shape = 's32[2]{0}', space=sflag, size = 0x8, scoped, tag = 'scoped memory for tpu_custom_call.1']
    #allocation5 [shape = 's32[2]{0}', space=sflag, size = 0x8, scoped, tag = 'scoped memory for tpu_custom_call.1']
    #allocation6 [shape = 'u8[2048]{0}', space=vmem, size = 0x800, scoped, tag = 'input window, operand 1, single buffered']
    #allocation7 [shape = 's32[1]{0}', space=sflag, size = 0x4, scoped, tag = 'scoped memory for tpu_custom_call.1']
    #allocation8 [shape = 'u8[1024]{0}', space=vmem, size = 0x400, scoped, tag = 'output window, operand 0, single buffered']
    %8 = vsyncpa [#allocation4], 0
    %s9 = scalar_lea.sflag [#allocation4], 1
    %10 = vsyncpa %s9, 0
    %11 = vsyncpa [#allocation7], 0
    %12 = vsyncpa [#allocation5], 0
    loop: start=0, step=1, limit=4
    $region2: #{tpu_custom_call.1} parent=1 // loop_pre_header
      _
    $region3: #{tpu_custom_call.1} parent=1 // loop_header
      %s14 = sphi 0, %s18
      %p15 = scmp.ge.s32.totalorder %s14, 4
      %s21 = sphi 0, %s33
      %s22 = sphi 0, %s29
      %s23 = sphi 0, %s21
      %s24 = sphi 0, %s22
      %s25 = sphi 0, %s23
      %s26 = sphi 0, %s24
      %s38 = sphi 0, %s40
      %s41 = sphi 0, %s38
      %s42 = sphi 0, %s41
      %s58 = sphi 0, %s42
      %s62 = sphi 0, %s62
      %s64 = sphi 0, %s62
      %s65 = sphi 0, %s64
      %s79 = sphi 0, %s65
      %s83 = sphi 0, %s83
      %s85 = sphi 0, %s83
      %s86 = sphi 0, %s85
      %s100 = sphi 0, %s86
      %s106 = sphi 0, %s108
      %s109 = sphi 0, %s106
      %s110 = sphi 0, %s109
      %s126 = sphi 0, %s110
    $region4: #{tpu_custom_call.1} parent=1 // loop_header_branch
      %17 = sbr.rel (%p15) target = $region8
    $region5: #{tpu_custom_call.1} parent=1 // loop_body
      %s19 = ssub.s32 %s14, 1
      %s20 = ssub.s32 %s14, 2
      %s27 = sadd.s32 1, %s22
      %p28 = scmp.ge.s32.totalorder %s27, 2
      %s29 = scalar_select %p28, 0, %s27
      %s30 = sadd.s32 1, %s21
      %s31 = scalar_select %p28, %s30, %s21
      %p32 = scmp.ge.s32.totalorder %s31, 1
      %s33 = scalar_select %p32, 0, %s31
      %s34 = ssub.s32 %s21, %s33
      %s35 = ssub.s32 %s22, %s29
      %s36 = sor.u32 %s34, %s35
      %p37 = scmp.eq.s32.totalorder %s36, 0
      %s39 = sadd.s32 %s38, 1
      %s40 = scalar_select %p37, %s38, %s39
      %p43 = pneg %p37
      %p44 = scmp.eq.s32.totalorder %s14, 1
      %p45 = por %p43, %p44
      %p46 = scmp.ne.s32.totalorder %s38, %s41
      %p47 = scmp.eq.s32.totalorder %s14, 0
      %p48 = por %p46, %p47
      %p49 = scmp.ne.s32.totalorder %s38, %s41
      %p50 = scmp.eq.s32.totalorder %s19, 1
      %p51 = por %p49, %p50
      %p52 = scmp.ne.s32.totalorder %s41, %s42
      %p53 = scmp.eq.s32.totalorder %s19, 0
      %p54 = por %p52, %p53
      %p55 = scmp.ne.s32.totalorder %s41, %s42
      %p56 = scmp.eq.s32.totalorder %s20, 1
      %p57 = por %p55, %p56
      %p59 = scmp.ne.s32.totalorder %s42, %s58
      %p60 = scmp.eq.s32.totalorder %s20, 0
      %p61 = por %p59, %p60
      %s63 = sadd.s32 %s62, 1
      %p66 = scmp.eq.s32.totalorder %s14, 1
      %p67 = scmp.ne.s32.totalorder %s62, %s64
      %p68 = scmp.eq.s32.totalorder %s14, 0
      %p69 = por %p67, %p68
      %p70 = scmp.ne.s32.totalorder %s62, %s64
      %p71 = scmp.eq.s32.totalorder %s19, 1
      %p72 = por %p70, %p71
      %p73 = scmp.ne.s32.totalorder %s64, %s65
      %p74 = scmp.eq.s32.totalorder %s19, 0
      %p75 = por %p73, %p74
      %p76 = scmp.ne.s32.totalorder %s64, %s65
      %p77 = scmp.eq.s32.totalorder %s20, 1
      %p78 = por %p76, %p77
      %p80 = scmp.ne.s32.totalorder %s65, %s79
      %p81 = scmp.eq.s32.totalorder %s20, 0
      %p82 = por %p80, %p81
      %s84 = sadd.s32 %s83, 1
      %p87 = scmp.eq.s32.totalorder %s14, 1
      %p88 = scmp.ne.s32.totalorder %s83, %s85
      %p89 = scmp.eq.s32.totalorder %s14, 0
      %p90 = por %p88, %p89
      %p91 = scmp.ne.s32.totalorder %s83, %s85
      %p92 = scmp.eq.s32.totalorder %s19, 1
      %p93 = por %p91, %p92
      %p94 = scmp.ne.s32.totalorder %s85, %s86
      %p95 = scmp.eq.s32.totalorder %s19, 0
      %p96 = por %p94, %p95
      %p97 = scmp.ne.s32.totalorder %s85, %s86
      %p98 = scmp.eq.s32.totalorder %s20, 1
      %p99 = por %p97, %p98
      %p101 = scmp.ne.s32.totalorder %s86, %s100
      %p102 = scmp.eq.s32.totalorder %s20, 0
      %p103 = por %p101, %p102
      %s104 = ssub.s32 %s21, %s33
      %p105 = scmp.eq.s32.totalorder %s104, 0
      %s107 = sadd.s32 %s106, 1
      %s108 = scalar_select %p105, %s106, %s107
      %p111 = pneg %p105
      %p112 = scmp.eq.s32.totalorder %s14, 1
      %p113 = por %p111, %p112
      %p114 = scmp.ne.s32.totalorder %s106, %s109
      %p115 = scmp.eq.s32.totalorder %s14, 0
      %p116 = por %p114, %p115
      %p117 = scmp.ne.s32.totalorder %s106, %s109
      %p118 = scmp.eq.s32.totalorder %s19, 1
      %p119 = por %p117, %p118
      %p120 = scmp.ne.s32.totalorder %s109, %s110
      %p121 = scmp.eq.s32.totalorder %s19, 0
      %p122 = por %p120, %p121
      %p123 = scmp.ne.s32.totalorder %s109, %s110
      %p124 = scmp.eq.s32.totalorder %s20, 1
      %p125 = por %p123, %p124
      %p127 = scmp.ne.s32.totalorder %s110, %s126
      %p128 = scmp.eq.s32.totalorder %s20, 0
      %p129 = por %p127, %p128
      %p130 = scmp.le.s32.totalorder 1, %s14
      %p131 = scmp.lt.s32.totalorder %s14, 3
      %p132 = pnand %p130, %p131
      %p133 = pneg %p132
      // Predicated region
      $region9: #{tpu_custom_call.1} parent=5 // pred_check
        _
      $region10: #{tpu_custom_call.1} parent=5 // pred_check_branch
        %135 = sbr.rel (%p132) target = $region12
      $region11: #{tpu_custom_call.1} parent=5 // pred_region
        %s136 = ssub.s32 %s14, 1
        // Predicated region
        $region13: #{tpu_custom_call.1} parent=11 // pred_check
          %p137 = pneg %p75
        $region14: #{tpu_custom_call.1} parent=11 // pred_check_branch
          %139 = sbr.rel (%p137) target = $region16
        $region15: #{tpu_custom_call.1} parent=11 // pred_region
          %s141 = ssub.s32 64, 64
          %142 = vsyncadd [#allocation7], %s141
          %s144 = sshll.u32 [#allocation6], 4
          %s145 = int_to_ptr.vmem [resolvable:$true] %s144
          %147 = dma.hbm_to_vmem [thread:$0]  %s1, 64, %s145, [#allocation7]
        $region16: #{tpu_custom_call.1} parent=11 // pred_fallthru
          _
        // Predicated region
        $region17: #{tpu_custom_call.1} parent=11 // pred_check
          %p148 = pneg %p96
        $region18: #{tpu_custom_call.1} parent=11 // pred_check_branch
          %150 = sbr.rel (%p148) target = $region20
        $region19: #{tpu_custom_call.1} parent=11 // pred_region
          _
        $region20: #{tpu_custom_call.1} parent=11 // pred_fallthru
          _
      $region12: #{tpu_custom_call.1} parent=5 // pred_fallthru
        _
      %p151 = scmp.lt.s32.totalorder %s14, 2
      // Predicated region
      $region21: #{tpu_custom_call.1} parent=5 // pred_check
        %p152 = pneg %p151
      $region22: #{tpu_custom_call.1} parent=5 // pred_check_branch
        %154 = sbr.rel (%p152) target = $region24
      $region23: #{tpu_custom_call.1} parent=5 // pred_region
        // Predicated region
        $region25: #{tpu_custom_call.1} parent=23 // pred_check
          %p155 = pneg %p48
        $region26: #{tpu_custom_call.1} parent=23 // pred_check_branch
          %157 = sbr.rel (%p155) target = $region28
        $region27: #{tpu_custom_call.1} parent=23 // pred_region
          %s158 = sand.u32 %s38, 1
          %s159 = scalar_lea.sflag [#allocation4], %s158
          %s160 = sand.u32 %s38, 1
          %s161 = smul.addr %s160, 8
          %s162 = scalar_lea.vmem [#allocation3], %s161
          %s163 = smul.u32 2, %s21
          %s165 = ssub.s32 128, 128
          %166 = vsyncadd %s159, %s165
          %s167 = smul.addr %s163, 2
          %s168 = sadd.s32 %s22, %s167
          %s169 = smul.addr %s168, 64
          %s170 = scalar_lea.hbm %s0, %s169
          %s171 = sshll.u32 %s162, 4
          %s172 = int_to_ptr.vmem [resolvable:$true] %s171
          %177 = dma.hbm_to_vmem [thread:$0]  %s170, 128, %s172, %s159, 128, 64, 4
        $region28: #{tpu_custom_call.1} parent=23 // pred_fallthru
          _
      $region24: #{tpu_custom_call.1} parent=5 // pred_fallthru
        _
      %p178 = scmp.le.s32.totalorder 1, %s14
      %p179 = scmp.lt.s32.totalorder %s14, 3
      %p180 = pnand %p178, %p179
      %p181 = pneg %p180
      // Predicated region
      $region29: #{tpu_custom_call.1} parent=5 // pred_check
        _
      $region30: #{tpu_custom_call.1} parent=5 // pred_check_branch
        %183 = sbr.rel (%p180) target = $region32
      $region31: #{tpu_custom_call.1} parent=5 // pred_region
        %s184 = ssub.s32 %s14, 1
        %s185 = sand.u32 %s41, 1
        %s186 = scalar_lea.sflag [#allocation4], %s185
        %s187 = sand.u32 %s41, 1
        %s188 = smul.addr %s187, 8
        %s189 = scalar_lea.vmem [#allocation3], %s188
        // Predicated region
        $region33: #{tpu_custom_call.1} parent=31 // pred_check
          %p190 = pneg %p54
        $region34: #{tpu_custom_call.1} parent=31 // pred_check_branch
          %192 = sbr.rel (%p190) target = $region36
        $region35: #{tpu_custom_call.1} parent=31 // pred_region
          %193 = dma.done %s186, 128
        $region36: #{tpu_custom_call.1} parent=31 // pred_fallthru
          _
        // Predicated region
        $region37: #{tpu_custom_call.1} parent=31 // pred_check
          %p194 = pneg %p75
        $region38: #{tpu_custom_call.1} parent=31 // pred_check_branch
          %196 = sbr.rel (%p194) target = $region40
        $region39: #{tpu_custom_call.1} parent=31 // pred_region
          %197 = dma.done [#allocation7], 64
        $region40: #{tpu_custom_call.1} parent=31 // pred_fallthru
          _
        %s198 = sand.u32 %s41, 1
        %s199 = scalar_lea.sflag [#allocation4], %s198
        %s200 = sand.u32 %s41, 1
        %s201 = smul.addr %s200, 8
        %s202 = scalar_lea.vmem [#allocation3], %s201
        %p203 = pneg %p54
        %p204 = pneg %p51
        %p205 = pneg %p75
        %p206 = pneg %p72
        %p207 = pneg %p96
        %p208 = pneg %p93
        %p209 = pneg %p122
        %p210 = pneg %p119
        %s211 = smul.u32 2, %s23
        %p212 = scmp.eq.s32.totalorder %s24, 0
        // Predicated region
        $region41: #{tpu_custom_call.1} parent=31 // pred_check
          %p213 = pneg %p212
        $region42: #{tpu_custom_call.1} parent=31 // pred_check_branch
          %215 = sbr.rel (%p213) target = $region44
        $region43: #{tpu_custom_call.1} parent=31 // pred_region
          %vm216 = vcmask 25600
          %217 = vst.msk [vmem:[#allocation2] sm:$0x3] %vm216, 0.0
        $region44: #{tpu_custom_call.1} parent=31 // pred_fallthru
          _
        %v218 = vld [vmem:[%s189] sm:$0xf]
        %v219 = vld [vmem:[%s189 + $0x4] sm:$0xf]
        %v220 = vld [vmem:[#allocation2] sm:$0x3]
        %vm221 = vcmask 1043456
        %v222 = vsel %vm221, %v218, 0.0
        %223 = vadd.xlane.f32.xlu0 %v222
        %v224 = vpop.xlane.xlu0 %223
        %v225 = vsel %vm221, %v219, 0.0
        %226 = vadd.xlane.f32.xlu0 %v225
        %v227 = vpop.xlane.xlu0 %226
        %v230 = vlaneseq
        %v231 = vand.u32 %v230, 127
        %v232 = vlaneseq
        %v233 = vshrl.u32 %v232, 7
        %v234 = vsub.s32 %v231, %v233
        %v235 = vrot.slane %v224, %v234
        %v236 = vlaneseq
        %v237 = vshrl.u32 %v236, 7
        %v238 = vsub.s32 %v231, %v237
        %v239 = vrot.slane %v227, %v238
        %vm240 = vcmask 1041409
        %v241 = vsel %vm240, %v239, %v235
        %v243 = vadd.f32 %v220, %v241
        %vm244 = vcmask 25600
        %245 = vst.msk [vmem:[#allocation2] sm:$0x3] %vm244, %v243
        %p246 = scmp.eq.s32.totalorder %s24, 1
        // Predicated region
        $region45: #{tpu_custom_call.1} parent=31 // pred_check
          %p247 = pneg %p246
        $region46: #{tpu_custom_call.1} parent=31 // pred_check_branch
          %249 = sbr.rel (%p247) target = $region48
        $region47: #{tpu_custom_call.1} parent=31 // pred_region
          %v250 = vld [vmem:[#allocation2] sm:$0x3]
          %v251 = vld [vmem:[#allocation6] sm:$0xf]
          %v252 = vld [vmem:[%s2] sm:$0x1]
          %v254 = vlaneseq
          %v255 = vshrl.u32 %v254, 7
          %v256 = vsub.s32 0, %v255
          %v257 = vrot.slane %v252, %v256
          %vm259 = vcmask 31744
          %v261 = vsel %vm259, %v250, 0
          %v264 = vsel %vm221, %v251, 0
          %266 = vmatprep.subr.mxu0 0.0
          %267 = vmatpush1.msra.mxu0 0.0
          %268 = vmatprep.subr.mxu0 0.0
          %269 = vmatpush1.msra.mxu0 0.0
          %270 = vmatprep.subr.mxu0 0.0
          %271 = vmatpush1.msra.mxu0 0.0
          %272 = vmatprep.subr.mxu0 0.0
          %273 = vmatpush1.msra.mxu0 0.0
          %274 = vmatprep.subr.mxu0 0.0
          %275 = vmatpush1.msra.mxu0 0.0
          %276 = vmatprep.subr.mxu0 0.0
          %277 = vmatpush1.msra.mxu0 0.0
          %278 = vmatprep.subr.mxu0 0.0
          %279 = vmatpush1.msra.mxu0 0.0
          %280 = vmatprep.subr.mxu0 0.0
          %281 = vmatpush1.msra.mxu0 0.0
          %282 = vmatprep.subr.mxu0 0.0
          %283 = vmatpush1.msra.mxu0 0.0
          %284 = vmatprep.subr.mxu0 0.0
          %285 = vmatpush1.msra.mxu0 0.0
          %286 = vmatprep.subr.mxu0 0.0
          %287 = vmatpush1.msra.mxu0 0.0
          %288 = vmatprep.subr.mxu0 0.0
          %289 = vmatpush1.msra.mxu0 0.0
          %290 = vmatprep.subr.mxu0 0.0
          %291 = vmatpush1.msra.mxu0 0.0
          %292 = vmatprep.subr.mxu0 0.0
          %293 = vmatpush1.msra.mxu0 0.0
          %294 = vmatprep.subr.mxu0 0.0
          %295 = vmatpush1.msra.mxu0 0.0
          %296 = vmatprep.subr.mxu0 0.0
          %297 = vmatpush1.msra.mxu0 %v264
          %298 = vmatprep.subr.mxu0 0.0
          %299 = vmatpush2.msra.mxu0 0.0
          %300 = vmatprep.subr.mxu0 0.0
          %301 = vmatpush2.msra.mxu0 0.0
          %302 = vmatprep.subr.mxu0 0.0
          %303 = vmatpush2.msra.mxu0 0.0
          %304 = vmatprep.subr.mxu0 0.0
          %305 = vmatpush2.msra.mxu0 0.0
          %306 = vmatprep.subr.mxu0 0.0
          %307 = vmatpush2.msra.mxu0 0.0
          %308 = vmatprep.subr.mxu0 0.0
          %309 = vmatpush2.msra.mxu0 0.0
          %310 = vmatprep.subr.mxu0 0.0
          %311 = vmatpush2.msra.mxu0 0.0
          %312 = vmatprep.subr.mxu0 0.0
          %313 = vmatpush2.msra.mxu0 0.0
          %314 = vmatprep.subr.mxu0 0.0
          %315 = vmatpush2.msra.mxu0 0.0
          %316 = vmatprep.subr.mxu0 0.0
          %317 = vmatpush2.msra.mxu0 0.0
          %318 = vmatprep.subr.mxu0 0.0
          %319 = vmatpush2.msra.mxu0 0.0
          %320 = vmatprep.subr.mxu0 0.0
          %321 = vmatpush2.msra.mxu0 0.0
          %322 = vmatprep.subr.mxu0 0.0
          %323 = vmatpush2.msra.mxu0 0.0
          %324 = vmatprep.subr.mxu0 0.0
          %325 = vmatpush2.msra.mxu0 0.0
          %326 = vmatprep.subr.mxu0 0.0
          %327 = vmatpush2.msra.mxu0 0.0
          %328 = vmatprep.subr.mxu0 0.0
          %329 = vmatpush2.msra.mxu0 0.0
          %330 = vmatprep.mubr.f32.mxu0 0.0
          %331 = vmatmul.mubr.f32.gmra.mxu0 %v261
          %v332 = vpop.f32.mrf.mxu0
          %v333 = vadd.f32 %v257, %v332
          %v334 = vpop.f32.mrf.mxu0
          %335 = vdwg.mxu0
          %vm336 = vcmask 58368
          %337 = vst.msk [vmem:[#allocation8] sm:$0x3] %vm336, %v333
        $region48: #{tpu_custom_call.1} parent=31 // pred_fallthru
          _
        // Predicated region
        $region49: #{tpu_custom_call.1} parent=31 // pred_check
          %p338 = pneg %p119
        $region50: #{tpu_custom_call.1} parent=31 // pred_check_branch
          %340 = sbr.rel (%p338) target = $region52
        $region51: #{tpu_custom_call.1} parent=31 // pred_region
          %s342 = ssub.s32 32, 32
          %343 = vsyncadd [#allocation5], %s342
          %s344 = smul.addr %s23, 32
          %s345 = scalar_lea.hbm %s3, %s344
          %s347 = sshll.u32 [#allocation8], 4
          %s348 = int_to_ptr.vmem [resolvable:$true] %s347
          %350 = dma.vmem_to_hbm [thread:$0]  %s348, 32, %s345, [#allocation5]
        $region52: #{tpu_custom_call.1} parent=31 // pred_fallthru
          _
        // Predicated region
        $region53: #{tpu_custom_call.1} parent=31 // pred_check
          %p351 = pneg %p119
        $region54: #{tpu_custom_call.1} parent=31 // pred_check_branch
          %353 = sbr.rel (%p351) target = $region56
        $region55: #{tpu_custom_call.1} parent=31 // pred_region
          %354 = dma.done [#allocation5], 32
        $region56: #{tpu_custom_call.1} parent=31 // pred_fallthru
          _
      $region32: #{tpu_custom_call.1} parent=5 // pred_fallthru
        _
      %p355 = scmp.le.s32.totalorder 2, %s14
      // Predicated region
      $region57: #{tpu_custom_call.1} parent=5 // pred_check
        %p356 = pneg %p355
      $region58: #{tpu_custom_call.1} parent=5 // pred_check_branch
        %358 = sbr.rel (%p356) target = $region60
      $region59: #{tpu_custom_call.1} parent=5 // pred_region
        %s359 = ssub.s32 %s14, 2
      $region60: #{tpu_custom_call.1} parent=5 // pred_fallthru
        _
    $region6: #{tpu_custom_call.1} parent=1 // loop_footer
      %s18 = sadd.s32 1, %s14
    $region7: #{tpu_custom_call.1} parent=1 // loop_footer_branch
      %13 = sbr.rel target = $region3
    $region8: #{tpu_custom_call.1} parent=1 // loop_exit
      _
    %360 = vsyncpa [#allocation4], 1
    %s361 = scalar_lea.sflag [#allocation4], 1
    %362 = vsyncpa %s361, 1
    %363 = vsyncpa [#allocation7], 1
    %364 = vsyncpa [#allocation5], 1
    %s365 = scalar_lea.sflag [#allocation5], 1
    %366 = vsyncpa %s365, 1

</llo_original>
